<compile_context>
chip_gen: v7x
topology: tpu7x:2x2x1
jax: 0.10.0
libtpu: 0.0.40
codegen_flags: <defaults>
</compile_context>

<pallas_src>
import functools

import jax
import jax.numpy as jnp
from jax.experimental import pallas as pl
from jax.experimental.pallas import tpu as pltpu


def _round_up(v, m):
    return (v + m - 1) // m * m


def _dim_mixing_kernel(x_ref, scale_ref, shift_ref, w1_ref, b1_ref,
                       w2_ref, b2_ref, o_ref):
    # Folded BatchNorm2d affine (eval mode) in f32 on the VPU.
    x = x_ref[...].astype(jnp.float32)
    xn = x * scale_ref[...] + shift_ref[...]                  # (tm, d_llm_p)

    # fc1 + bias + ReLU.  MXU matmul in the weight dtype (bf16), f32 accumulate.
    h = jnp.dot(xn.astype(w1_ref.dtype), w1_ref[...],
                preferred_element_type=jnp.float32)
    h = jnp.maximum(h + b1_ref[...], 0.0)                     # (tm, d_ff_p)

    # Dropout: identity in eval mode (PyTorch nn.Dropout.eval()).
    # fc2 + bias.
    y = jnp.dot(h.astype(w2_ref.dtype), w2_ref[...],
                preferred_element_type=jnp.float32)
    y = y + b2_ref[...]

    o_ref[...] = y.astype(o_ref.dtype)


@functools.partial(
    jax.jit,
    static_argnames=("eps", "tm", "compute_dtype", "single_buffer_weights"))
def dimension_mixing(x, bn_gamma, bn_beta, bn_mean, bn_var,
                     w1, b1, w2, b2, *, eps=1e-5, tm=512,
                     compute_dtype=jnp.bfloat16,
                     single_buffer_weights=True):
    """x: (B, N, d_llm).  Returns (B, N, d_ff)."""
    B, N, d_llm = x.shape
    d_ff = w1.shape[0]
    M = B * N

    # Lane-dense feature dims (multiples of 128); row tile multiple of 8,
    # clamped to the (padded) row count so small inputs still work.
    d_llm_p = _round_up(d_llm, 128)
    d_ff_p = _round_up(d_ff, 128)
    tm_eff = min(tm, _round_up(M, 8))
    M_pad = _round_up(M, tm_eff)

    # Fold BatchNorm2d(N) (eval mode, running stats) into a per-channel affine,
    # then broadcast to one (scale, shift) pair per row (b, n).
    ch_scale = (bn_gamma.astype(jnp.float32)
                / jnp.sqrt(bn_var.astype(jnp.float32) + eps))
    ch_shift = (bn_beta.astype(jnp.float32)
                - bn_mean.astype(jnp.float32) * ch_scale)
    scale = jnp.broadcast_to(ch_scale[None, :], (B, N)).reshape(M, 1)
    shift = jnp.broadcast_to(ch_shift[None, :], (B, N)).reshape(M, 1)

    x2d = x.reshape(M, d_llm)
    x2d = jnp.pad(x2d, ((0, M_pad - M), (0, d_llm_p - d_llm)))
    scale = jnp.pad(scale, ((0, M_pad - M), (0, 0)))
    shift = jnp.pad(shift, ((0, M_pad - M), (0, 0)))

    # PyTorch Linear stores weight as (out, in); the kernel right-multiplies.
    # Zero-padding contributes nothing to the result.
    w1_t = jnp.pad(w1.T, ((0, d_llm_p - d_llm), (0, d_ff_p - d_ff))).astype(compute_dtype)
    w2_t = jnp.pad(w2.T, ((0, d_ff_p - d_ff), (0, d_ff_p - d_ff))).astype(compute_dtype)
    b1_2d = jnp.pad(b1, (0, d_ff_p - d_ff)).reshape(1, d_ff_p).astype(jnp.float32)
    b2_2d = jnp.pad(b2, (0, d_ff_p - d_ff)).reshape(1, d_ff_p).astype(jnp.float32)

    # Weights / biases have a constant block index -> single-buffer them.
    def _resident_spec(shape):
        if single_buffer_weights:
            return pl.BlockSpec(shape, lambda i: (0, 0),
                                pipeline_mode=pl.Buffered(1))
        return pl.BlockSpec(shape, lambda i: (0, 0))

    # Explicit VMEM budget: double-buffered streaming operands + resident
    # weights + headroom, capped at v7x's 64 MiB physical VMEM.
    x_b = jnp.dtype(x2d.dtype).itemsize
    o_b = jnp.dtype(x.dtype).itemsize
    w_b = jnp.dtype(compute_dtype).itemsize
    stream_bytes = 2 * (tm_eff * d_llm_p * x_b
                        + 2 * tm_eff * 4
                        + tm_eff * d_ff_p * o_b)
    resident_bytes = ((d_llm_p * d_ff_p + d_ff_p * d_ff_p) * w_b
                      + 2 * d_ff_p * 4)
    if not single_buffer_weights:
        resident_bytes *= 2
    vmem_limit = int(min(max(stream_bytes + resident_bytes + (8 << 20),
                             32 << 20), 64 << 20))

    grid = (M_pad // tm_eff,)
    out2d = pl.pallas_call(
        _dim_mixing_kernel,
        out_shape=jax.ShapeDtypeStruct((M_pad, d_ff_p), x.dtype),
        grid_spec=pltpu.PrefetchScalarGridSpec(
            num_scalar_prefetch=0,
            grid=grid,
            in_specs=[
                pl.BlockSpec((tm_eff, d_llm_p), lambda i: (i, 0)),   # x rows
                pl.BlockSpec((tm_eff, 1), lambda i: (i, 0)),         # row scale
                pl.BlockSpec((tm_eff, 1), lambda i: (i, 0)),         # row shift
                _resident_spec((d_llm_p, d_ff_p)),                   # W1^T
                _resident_spec((1, d_ff_p)),                         # b1
                _resident_spec((d_ff_p, d_ff_p)),                    # W2^T
                _resident_spec((1, d_ff_p)),                         # b2
            ],
            out_specs=pl.BlockSpec((tm_eff, d_ff_p), lambda i: (i, 0)),
        ),
        compiler_params=pltpu.CompilerParams(
            dimension_semantics=("parallel",),
            vmem_limit_bytes=vmem_limit),
    )(x2d, scale, shift, w1_t, b1_2d, w2_t, b2_2d)

    return out2d[:M, :d_ff].reshape(B, N, d_ff)


if __name__ == "__main__":
    # Small, module-consistent shapes: batch=2, N=4 series, d_llm=32, d_ff=32.
    B, N, d_llm, d_ff = 2, 4, 32, 32

    key = jax.random.PRNGKey(0)
    kx, kg, kb, km, kv, kw1, kb1, kw2, kb2 = jax.random.split(key, 9)

    x = jax.random.normal(kx, (B, N, d_llm), dtype=jnp.float32)

    # Deterministic synthetic parameters (shapes match nn.Module __init__).
    bn_gamma = 1.0 + 0.1 * jax.random.normal(kg, (N,), dtype=jnp.float32)
    bn_beta = 0.1 * jax.random.normal(kb, (N,), dtype=jnp.float32)
    bn_mean = 0.05 * jax.random.normal(km, (N,), dtype=jnp.float32)
    bn_var = jnp.abs(jax.random.normal(kv, (N,), dtype=jnp.float32)) + 0.5

    w1 = jax.random.normal(kw1, (d_ff, d_llm), dtype=jnp.float32) / jnp.sqrt(d_llm)
    b1 = 0.01 * jax.random.normal(kb1, (d_ff,), dtype=jnp.float32)
    w2 = jax.random.normal(kw2, (d_ff, d_ff), dtype=jnp.float32) / jnp.sqrt(d_ff)
    b2 = 0.01 * jax.random.normal(kb2, (d_ff,), dtype=jnp.float32)

    args = (x, bn_gamma, bn_beta, bn_mean, bn_var, w1, b1, w2, b2)
    try:
        out = dimension_mixing(*args)
    except Exception:
        # Fallback if this jax version rejects single-buffered resident specs.
        out = dimension_mixing(*args, single_buffer_weights=False)
    out = jax.block_until_ready(out)

    # Pure-JAX references.
    scale = bn_gamma / jnp.sqrt(bn_var + 1e-5)
    shift = bn_beta - bn_mean * scale
    xn = x * scale[None, :, None] + shift[None, :, None]

    # Reference matching the kernel's bf16-matmul / f32-accumulate path.
    h = jnp.dot(xn.astype(jnp.bfloat16), w1.T.astype(jnp.bfloat16),
                preferred_element_type=jnp.float32) + b1
    h = jnp.maximum(h, 0.0)
    ref_bf16 = jnp.dot(h.astype(jnp.bfloat16), w2.T.astype(jnp.bfloat16),
                       preferred_element_type=jnp.float32) + b2
    # Full-f32 reference (PyTorch eval-mode math); loose tolerance for bf16.
    ref_f32 = jnp.maximum(xn @ w1.T + b1, 0.0) @ w2.T + b2

    assert out.shape == (B, N, d_ff)
    assert jnp.allclose(out, ref_bf16, atol=1e-2, rtol=1e-2)
    assert jnp.allclose(out, ref_f32, atol=6e-2, rtol=6e-2)

    print("KERNEL_OK")
</pallas_src>

<mosaic_0001>
module attributes {stable_mosaic.version = 11 : i64} {
  func.func @_dim_mixing_kernel(%arg0: i32, %arg1: memref<8x128xf32, #tpu.memory_space<vmem>>, %arg2: memref<8x1xf32, #tpu.memory_space<vmem>>, %arg3: memref<8x1xf32, #tpu.memory_space<vmem>>, %arg4: memref<128x128xbf16, #tpu.memory_space<vmem>>, %arg5: memref<1x128xf32, #tpu.memory_space<vmem>>, %arg6: memref<128x128xbf16, #tpu.memory_space<vmem>>, %arg7: memref<1x128xf32, #tpu.memory_space<vmem>>, %arg8: memref<8x128xf32, #tpu.memory_space<vmem>>) attributes {dimension_semantics = [#tpu.dimension_semantics<parallel>], iteration_bounds = array<i64: 1>, scalar_prefetch = 0 : i64, scratch_operands = 0 : i64, tpu.core_type = #tpu.core_type<tc>, window_params = [{transform_indices = @transform_0, window_bounds = array<i64: 8, 128>}, {transform_indices = @transform_1, window_bounds = array<i64: 8, 1>}, {transform_indices = @transform_2, window_bounds = array<i64: 8, 1>}, {pipeline_mode = #tpu.pipeline_mode<synchronous>, transform_indices = @transform_3, window_bounds = array<i64: 128, 128>}, {pipeline_mode = #tpu.pipeline_mode<synchronous>, transform_indices = @transform_4, window_bounds = array<i64: 1, 128>}, {pipeline_mode = #tpu.pipeline_mode<synchronous>, transform_indices = @transform_5, window_bounds = array<i64: 128, 128>}, {pipeline_mode = #tpu.pipeline_mode<synchronous>, transform_indices = @transform_6, window_bounds = array<i64: 1, 128>}, {transform_indices = @transform_7, window_bounds = array<i64: 8, 128>}]} {
    %c0 = arith.constant 0 : index
    %c0_0 = arith.constant 0 : index
    %0 = vector.load %arg1[%c0, %c0_0] : memref<8x128xf32, #tpu.memory_space<vmem>>, vector<8x128xf32>
    %c0_1 = arith.constant 0 : index
    %c0_2 = arith.constant 0 : index
    %1 = vector.load %arg2[%c0_1, %c0_2] : memref<8x1xf32, #tpu.memory_space<vmem>>, vector<8x1xf32>
    %2 = vector.broadcast %1 : vector<8x1xf32> to vector<8x128xf32>
    %3 = arith.mulf %0, %2 : vector<8x128xf32>
    %c0_3 = arith.constant 0 : index
    %c0_4 = arith.constant 0 : index
    %4 = vector.load %arg3[%c0_3, %c0_4] : memref<8x1xf32, #tpu.memory_space<vmem>>, vector<8x1xf32>
    %5 = vector.broadcast %4 : vector<8x1xf32> to vector<8x128xf32>
    %6 = arith.addf %3, %5 : vector<8x128xf32>
    %7 = arith.truncf %6 : vector<8x128xf32> to vector<8x128xbf16>
    %c0_5 = arith.constant 0 : index
    %c0_6 = arith.constant 0 : index
    %8 = vector.load %arg4[%c0_5, %c0_6] : memref<128x128xbf16, #tpu.memory_space<vmem>>, vector<128x128xbf16>
    %cst = arith.constant dense<0.000000e+00> : vector<8x128xf32>
    %9 = tpu.matmul %7, %8, %cst {dimension_numbers = #tpu.dot_dimension_numbers<[1], [0], [0], [1], [0, 0, 1, 1], [], []>} : vector<8x128xbf16>, vector<128x128xbf16>, vector<8x128xf32> -> vector<8x128xf32>
    %c0_7 = arith.constant 0 : index
    %c0_8 = arith.constant 0 : index
    %10 = vector.load %arg5[%c0_7, %c0_8] : memref<1x128xf32, #tpu.memory_space<vmem>>, vector<1x128xf32>
    %11 = vector.broadcast %10 : vector<1x128xf32> to vector<8x128xf32>
    %12 = arith.addf %9, %11 : vector<8x128xf32>
    %cst_9 = arith.constant 0.000000e+00 : f32
    %13 = vector.broadcast %cst_9 : f32 to vector<8x128xf32>
    %14 = arith.maximumf %12, %13 : vector<8x128xf32>
    %15 = arith.truncf %14 : vector<8x128xf32> to vector<8x128xbf16>
    %c0_10 = arith.constant 0 : index
    %c0_11 = arith.constant 0 : index
    %16 = vector.load %arg6[%c0_10, %c0_11] : memref<128x128xbf16, #tpu.memory_space<vmem>>, vector<128x128xbf16>
    %cst_12 = arith.constant dense<0.000000e+00> : vector<8x128xf32>
    %17 = tpu.matmul %15, %16, %cst_12 {dimension_numbers = #tpu.dot_dimension_numbers<[1], [0], [0], [1], [0, 0, 1, 1], [], []>} : vector<8x128xbf16>, vector<128x128xbf16>, vector<8x128xf32> -> vector<8x128xf32>
    %c0_13 = arith.constant 0 : index
    %c0_14 = arith.constant 0 : index
    %18 = vector.load %arg7[%c0_13, %c0_14] : memref<1x128xf32, #tpu.memory_space<vmem>>, vector<1x128xf32>
    %19 = vector.broadcast %18 : vector<1x128xf32> to vector<8x128xf32>
    %20 = arith.addf %17, %19 : vector<8x128xf32>
    %c0_15 = arith.constant 0 : index
    %c0_16 = arith.constant 0 : index
    %21 = vector.load %arg8[%c0_15, %c0_16] : memref<8x128xf32, #tpu.memory_space<vmem>>, vector<8x128xf32>
    tpu.vector_store %arg8[%c0_15, %c0_16], %20 {strides = array<i32>} : memref<8x128xf32, #tpu.memory_space<vmem>>, vector<8x128xf32>,
    return
  }
  func.func @transform_0(%arg0: i32) -> (i32, i32) {
    %c0_i32 = arith.constant 0 : i32
    %c0_i32_0 = arith.constant 0 : i32
    return %arg0, %c0_i32 : i32, i32
  }
  func.func @transform_1(%arg0: i32) -> (i32, i32) {
    %c0_i32 = arith.constant 0 : i32
    %c0_i32_0 = arith.constant 0 : i32
    return %arg0, %c0_i32 : i32, i32
  }
  func.func @transform_2(%arg0: i32) -> (i32, i32) {
    %c0_i32 = arith.constant 0 : i32
    %c0_i32_0 = arith.constant 0 : i32
    return %arg0, %c0_i32 : i32, i32
  }
  func.func @transform_3(%arg0: i32) -> (i32, i32) {
    %c0_i32 = arith.constant 0 : i32
    %c0_i32_0 = arith.constant 0 : i32
    %c0_i32_1 = arith.constant 0 : i32
    return %c0_i32, %c0_i32_0 : i32, i32
  }
  func.func @transform_4(%arg0: i32) -> (i32, i32) {
    %c0_i32 = arith.constant 0 : i32
    %c0_i32_0 = arith.constant 0 : i32
    %c0_i32_1 = arith.constant 0 : i32
    return %c0_i32, %c0_i32_0 : i32, i32
  }
  func.func @transform_5(%arg0: i32) -> (i32, i32) {
    %c0_i32 = arith.constant 0 : i32
    %c0_i32_0 = arith.constant 0 : i32
    %c0_i32_1 = arith.constant 0 : i32
    return %c0_i32, %c0_i32_0 : i32, i32
  }
  func.func @transform_6(%arg0: i32) -> (i32, i32) {
    %c0_i32 = arith.constant 0 : i32
    %c0_i32_0 = arith.constant 0 : i32
    %c0_i32_1 = arith.constant 0 : i32
    return %c0_i32, %c0_i32_0 : i32, i32
  }
  func.func @transform_7(%arg0: i32) -> (i32, i32) {
    %c0_i32 = arith.constant 0 : i32
    %c0_i32_0 = arith.constant 0 : i32
    return %arg0, %c0_i32 : i32, i32
  }
}

module attributes {stable_mosaic.version = 11 : i64} {
  func.func @_dim_mixing_kernel(%arg0: i32, %arg1: memref<8x128xf32, #tpu.memory_space<vmem>>, %arg2: memref<8x1xf32, #tpu.memory_space<vmem>>, %arg3: memref<8x1xf32, #tpu.memory_space<vmem>>, %arg4: memref<128x128xbf16, #tpu.memory_space<vmem>>, %arg5: memref<1x128xf32, #tpu.memory_space<vmem>>, %arg6: memref<128x128xbf16, #tpu.memory_space<vmem>>, %arg7: memref<1x128xf32, #tpu.memory_space<vmem>>, %arg8: memref<8x128xf32, #tpu.memory_space<vmem>>) attributes {dimension_semantics = [#tpu.dimension_semantics<parallel>], iteration_bounds = array<i64: 1>, scalar_prefetch = 0 : i64, scratch_operands = 0 : i64, tpu.core_type = #tpu.core_type<tc>, window_params = [{transform_indices = @transform_0, window_bounds = array<i64: 8, 128>}, {transform_indices = @transform_1, window_bounds = array<i64: 8, 1>}, {transform_indices = @transform_2, window_bounds = array<i64: 8, 1>}, {pipeline_mode = #tpu.pipeline_mode<synchronous>, transform_indices = @transform_3, window_bounds = array<i64: 128, 128>}, {pipeline_mode = #tpu.pipeline_mode<synchronous>, transform_indices = @transform_4, window_bounds = array<i64: 1, 128>}, {pipeline_mode = #tpu.pipeline_mode<synchronous>, transform_indices = @transform_5, window_bounds = array<i64: 128, 128>}, {pipeline_mode = #tpu.pipeline_mode<synchronous>, transform_indices = @transform_6, window_bounds = array<i64: 1, 128>}, {transform_indices = @transform_7, window_bounds = array<i64: 8, 128>}]} {
    %c0 = arith.constant 0 : index
    %c0_0 = arith.constant 0 : index
    %0 = vector.load %arg1[%c0, %c0_0] : memref<8x128xf32, #tpu.memory_space<vmem>>, vector<8x128xf32>
    %c0_1 = arith.constant 0 : index
    %c0_2 = arith.constant 0 : index
    %1 = vector.load %arg2[%c0_1, %c0_2] : memref<8x1xf32, #tpu.memory_space<vmem>>, vector<8x1xf32>
    %2 = vector.broadcast %1 : vector<8x1xf32> to vector<8x128xf32>
    %3 = arith.mulf %0, %2 : vector<8x128xf32>
    %c0_3 = arith.constant 0 : index
    %c0_4 = arith.constant 0 : index
    %4 = vector.load %arg3[%c0_3, %c0_4] : memref<8x1xf32, #tpu.memory_space<vmem>>, vector<8x1xf32>
    %5 = vector.broadcast %4 : vector<8x1xf32> to vector<8x128xf32>
    %6 = arith.addf %3, %5 : vector<8x128xf32>
    %7 = arith.truncf %6 : vector<8x128xf32> to vector<8x128xbf16>
    %c0_5 = arith.constant 0 : index
    %c0_6 = arith.constant 0 : index
    %8 = vector.load %arg4[%c0_5, %c0_6] : memref<128x128xbf16, #tpu.memory_space<vmem>>, vector<128x128xbf16>
    %cst = arith.constant dense<0.000000e+00> : vector<8x128xf32>
    %9 = tpu.matmul %7, %8, %cst {dimension_numbers = #tpu.dot_dimension_numbers<[1], [0], [0], [1], [0, 0, 1, 1], [], []>} : vector<8x128xbf16>, vector<128x128xbf16>, vector<8x128xf32> -> vector<8x128xf32>
    %c0_7 = arith.constant 0 : index
    %c0_8 = arith.constant 0 : index
    %10 = vector.load %arg5[%c0_7, %c0_8] : memref<1x128xf32, #tpu.memory_space<vmem>>, vector<1x128xf32>
    %11 = vector.broadcast %10 : vector<1x128xf32> to vector<8x128xf32>
    %12 = arith.addf %9, %11 : vector<8x128xf32>
    %cst_9 = arith.constant 0.000000e+00 : f32
    %13 = vector.broadcast %cst_9 : f32 to vector<8x128xf32>
    %14 = arith.maximumf %12, %13 : vector<8x128xf32>
    %15 = arith.truncf %14 : vector<8x128xf32> to vector<8x128xbf16>
    %c0_10 = arith.constant 0 : index
    %c0_11 = arith.constant 0 : index
    %16 = vector.load %arg6[%c0_10, %c0_11] : memref<128x128xbf16, #tpu.memory_space<vmem>>, vector<128x128xbf16>
    %cst_12 = arith.constant dense<0.000000e+00> : vector<8x128xf32>
    %17 = tpu.matmul %15, %16, %cst_12 {dimension_numbers = #tpu.dot_dimension_numbers<[1], [0], [0], [1], [0, 0, 1, 1], [], []>} : vector<8x128xbf16>, vector<128x128xbf16>, vector<8x128xf32> -> vector<8x128xf32>
    %c0_13 = arith.constant 0 : index
    %c0_14 = arith.constant 0 : index
    %18 = vector.load %arg7[%c0_13, %c0_14] : memref<1x128xf32, #tpu.memory_space<vmem>>, vector<1x128xf32>
    %19 = vector.broadcast %18 : vector<1x128xf32> to vector<8x128xf32>
    %20 = arith.addf %17, %19 : vector<8x128xf32>
    %c0_15 = arith.constant 0 : index
    %c0_16 = arith.constant 0 : index
    %21 = vector.load %arg8[%c0_15, %c0_16] : memref<8x128xf32, #tpu.memory_space<vmem>>, vector<8x128xf32>
    tpu.vector_store %arg8[%c0_15, %c0_16], %20 {strides = array<i32>} : memref<8x128xf32, #tpu.memory_space<vmem>>, vector<8x128xf32>,
    return
  }
  func.func @transform_0(%arg0: i32) -> (i32, i32) {
    %c0_i32 = arith.constant 0 : i32
    %c0_i32_0 = arith.constant 0 : i32
    return %arg0, %c0_i32 : i32, i32
  }
  func.func @transform_1(%arg0: i32) -> (i32, i32) {
    %c0_i32 = arith.constant 0 : i32
    %c0_i32_0 = arith.constant 0 : i32
    return %arg0, %c0_i32 : i32, i32
  }
  func.func @transform_2(%arg0: i32) -> (i32, i32) {
    %c0_i32 = arith.constant 0 : i32
    %c0_i32_0 = arith.constant 0 : i32
    return %arg0, %c0_i32 : i32, i32
  }
  func.func @transform_3(%arg0: i32) -> (i32, i32) {
    %c0_i32 = arith.constant 0 : i32
    %c0_i32_0 = arith.constant 0 : i32
    %c0_i32_1 = arith.constant 0 : i32
    return %c0_i32, %c0_i32_0 : i32, i32
  }
  func.func @transform_4(%arg0: i32) -> (i32, i32) {
    %c0_i32 = arith.constant 0 : i32
    %c0_i32_0 = arith.constant 0 : i32
    %c0_i32_1 = arith.constant 0 : i32
    return %c0_i32, %c0_i32_0 : i32, i32
  }
  func.func @transform_5(%arg0: i32) -> (i32, i32) {
    %c0_i32 = arith.constant 0 : i32
    %c0_i32_0 = arith.constant 0 : i32
    %c0_i32_1 = arith.constant 0 : i32
    return %c0_i32, %c0_i32_0 : i32, i32
  }
  func.func @transform_6(%arg0: i32) -> (i32, i32) {
    %c0_i32 = arith.constant 0 : i32
    %c0_i32_0 = arith.constant 0 : i32
    %c0_i32_1 = arith.constant 0 : i32
    return %c0_i32, %c0_i32_0 : i32, i32
  }
  func.func @transform_7(%arg0: i32) -> (i32, i32) {
    %c0_i32 = arith.constant 0 : i32
    %c0_i32_0 = arith.constant 0 : i32
    return %arg0, %c0_i32 : i32, i32
  }
}

</mosaic_0001>

<llo_original>
// kernel: dimension_mixing.1
$region0: #{dimension_mixing.1}
  #allocation0 [shape = 'u32[]', space=smem, size = 0x4, offset = 0x4, fixed_abs, tag = 'smem constant byte address 0x4 - core index']
  #allocation1 [shape = 'u32[144,128]{1,0:T(1,128)}', space=vmem, size = 0x12000, scoped, tag = 'internal scratch']
  %s0 = inlined_call_operand.vmem [shape: f32[8,128], index: 0, kind: input, shape index: {}]
  %s1 = inlined_call_operand.vmem [shape: f32[8,1], index: 1, kind: input, shape index: {}]
  %s2 = inlined_call_operand.vmem [shape: f32[8,1], index: 2, kind: input, shape index: {}]
  %s3 = inlined_call_operand.vmem [shape: bf16[128,128], index: 3, kind: input, shape index: {}]
  %s4 = inlined_call_operand.vmem [shape: f32[1,128], index: 4, kind: input, shape index: {}]
  %s5 = inlined_call_operand.vmem [shape: bf16[128,128], index: 5, kind: input, shape index: {}]
  %s6 = inlined_call_operand.vmem [shape: f32[1,128], index: 6, kind: input, shape index: {}]
  %s7 = inlined_call_operand.hbm [shape: f32[8,128], index: 7, kind: output, shape index: {}]
  %s8 = sld [smem:[#allocation0]]
  $region38: #{dimension_mixing.1} parent=0
    _
  %s10 = ssub.s32 1, %s8
  %s11 = scalar_select 0, %s10, %s8
  $region1: #{dimension_mixing.1} parent=0
    #allocation2 [shape = 'u8[4096]{0}', space=vmem, size = 0x1000, scoped, tag = 'output window, operand 0, single buffered']
    #allocation3 [shape = 's32[1]{0}', space=sflag, size = 0x4, scoped, tag = 'scoped memory for dimension_mixing.1']
    %12 = vsyncpa [#allocation3], 0
    // Predicated region
    $region2: #{dimension_mixing.1} parent=1 // pred_check
      _
    $region3: #{dimension_mixing.1} parent=1 // pred_check_branch
      %14 = sbr.rel (0) target = $region5
    $region4: #{dimension_mixing.1} parent=1 // pred_region
      _
    $region5: #{dimension_mixing.1} parent=1 // pred_fallthru
      _
    // Predicated region
    $region6: #{dimension_mixing.1} parent=1 // pred_check
      _
    $region7: #{dimension_mixing.1} parent=1 // pred_check_branch
      %16 = sbr.rel (0) target = $region9
    $region8: #{dimension_mixing.1} parent=1 // pred_region
      _
    $region9: #{dimension_mixing.1} parent=1 // pred_fallthru
      _
    // Predicated region
    $region10: #{dimension_mixing.1} parent=1 // pred_check
      _
    $region11: #{dimension_mixing.1} parent=1 // pred_check_branch
      %18 = sbr.rel (0) target = $region13
    $region12: #{dimension_mixing.1} parent=1 // pred_region
      _
    $region13: #{dimension_mixing.1} parent=1 // pred_fallthru
      _
    // Predicated region
    $region14: #{dimension_mixing.1} parent=1 // pred_check
      _
    $region15: #{dimension_mixing.1} parent=1 // pred_check_branch
      %20 = sbr.rel (0) target = $region17
    $region16: #{dimension_mixing.1} parent=1 // pred_region
      _
    $region17: #{dimension_mixing.1} parent=1 // pred_fallthru
      _
    // Predicated region
    $region18: #{dimension_mixing.1} parent=1 // pred_check
      _
    $region19: #{dimension_mixing.1} parent=1 // pred_check_branch
      %22 = sbr.rel (0) target = $region21
    $region20: #{dimension_mixing.1} parent=1 // pred_region
      _
    $region21: #{dimension_mixing.1} parent=1 // pred_fallthru
      _
    // Predicated region
    $region22: #{dimension_mixing.1} parent=1 // pred_check
      _
    $region23: #{dimension_mixing.1} parent=1 // pred_check_branch
      %24 = sbr.rel (0) target = $region25
    $region24: #{dimension_mixing.1} parent=1 // pred_region
      _
    $region25: #{dimension_mixing.1} parent=1 // pred_fallthru
      _
    // Predicated region
    $region26: #{dimension_mixing.1} parent=1 // pred_check
      _
    $region27: #{dimension_mixing.1} parent=1 // pred_check_branch
      %26 = sbr.rel (0) target = $region29
    $region28: #{dimension_mixing.1} parent=1 // pred_region
      _
    $region29: #{dimension_mixing.1} parent=1 // pred_fallthru
      _
    %v28 = vld [vmem:[%s0] sm:$0xff]
    %v29 = vld [vmem:[%s1] sm:$0xff]
    %31 = vset.pattern.permute.xlu0 0
    %32 = vperm.xlu0 %31, %v29
    %v33 = vpop.permute.xlu0 %32
    %v35 = vmul.f32 %v28, %v33
    %v36 = vld [vmem:[%s2] sm:$0xff]
    %38 = vset.pattern.permute.xlu0 0
    %39 = vperm.xlu0 %38, %v36
    %v40 = vpop.permute.xlu0 %39
    %v42 = vadd.f32 %v35, %v40
    %v43 = vpack.c.bf16 %v42, %v42
    %v44 = vld [vmem:[%s3] sm:$0xf]
    %v45 = vld [vmem:[%s3 + $0x4] sm:$0xf]
    %v46 = vld [vmem:[%s3 + $0x8] sm:$0xf]
    %v47 = vld [vmem:[%s3 + $0xc] sm:$0xf]
    %v48 = vld [vmem:[%s3 + $0x10] sm:$0xf]
    %v49 = vld [vmem:[%s3 + $0x14] sm:$0xf]
    %v50 = vld [vmem:[%s3 + $0x18] sm:$0xf]
    %v51 = vld [vmem:[%s3 + $0x1c] sm:$0xf]
    %v52 = vld [vmem:[%s3 + $0x20] sm:$0xf]
    %v53 = vld [vmem:[%s3 + $0x24] sm:$0xf]
    %v54 = vld [vmem:[%s3 + $0x28] sm:$0xf]
    %v55 = vld [vmem:[%s3 + $0x2c] sm:$0xf]
    %v56 = vld [vmem:[%s3 + $0x30] sm:$0xf]
    %v57 = vld [vmem:[%s3 + $0x34] sm:$0xf]
    %v58 = vld [vmem:[%s3 + $0x38] sm:$0xf]
    %v59 = vld [vmem:[%s3 + $0x3c] sm:$0xf]
    %v60 = vld [vmem:[%s4] sm:$0x1]
    %v62 = vlaneseq
    %v63 = vshrl.u32 %v62, 7
    %v64 = vsub.s32 0, %v63
    %v65 = vrot.slane %v60, %v64
    %v83 = vunpack.c.l.b16 %v44
    %v84 = vunpack.c.l.b16 %v45
    %v85 = vunpack.c.l.b16 %v46
    %v86 = vunpack.c.l.b16 %v47
    %v87 = vunpack.c.l.b16 %v48
    %v88 = vunpack.c.l.b16 %v49
    %v89 = vunpack.c.l.b16 %v50
    %v90 = vunpack.c.l.b16 %v51
    %v91 = vunpack.c.l.b16 %v52
    %v92 = vunpack.c.l.b16 %v53
    %v93 = vunpack.c.l.b16 %v54
    %v94 = vunpack.c.l.b16 %v55
    %v95 = vunpack.c.l.b16 %v56
    %v96 = vunpack.c.l.b16 %v57
    %v97 = vunpack.c.l.b16 %v58
    %v98 = vunpack.c.l.b16 %v59
    %v99 = vpack.c.b16 %v84, %v83
    %v100 = vpack.c.b16 %v86, %v85
    %v101 = vpack.c.b16 %v88, %v87
    %v102 = vpack.c.b16 %v90, %v89
    %v103 = vpack.c.b16 %v92, %v91
    %v104 = vpack.c.b16 %v94, %v93
    %v105 = vpack.c.b16 %v96, %v95
    %v106 = vpack.c.b16 %v98, %v97
    %115 = vmatprep.subr.bf16.mxu0 0
    %116 = vmatpush1.bf16.msra.mxu0 %v99
    %117 = vmatprep.subr.bf16.mxu0 0
    %118 = vmatpush1.bf16.msra.mxu0 %v100
    %119 = vmatprep.subr.bf16.mxu0 0
    %120 = vmatpush1.bf16.msra.mxu0 %v101
    %121 = vmatprep.subr.bf16.mxu0 0
    %122 = vmatpush1.bf16.msra.mxu0 %v102
    %123 = vmatprep.subr.bf16.mxu0 0
    %124 = vmatpush1.bf16.msra.mxu0 %v103
    %125 = vmatprep.subr.bf16.mxu0 0
    %126 = vmatpush1.bf16.msra.mxu0 %v104
    %127 = vmatprep.subr.bf16.mxu0 0
    %128 = vmatpush1.bf16.msra.mxu0 %v105
    %129 = vmatprep.subr.bf16.mxu0 0
    %130 = vmatpush1.bf16.msra.mxu0 %v106
    %131 = vmatprep.subr.bf16.mxu0 0
    %132 = vmatpush1.bf16.msra.mxu0 0
    %133 = vmatprep.subr.bf16.mxu0 0
    %134 = vmatpush1.bf16.msra.mxu0 0
    %135 = vmatprep.subr.bf16.mxu0 0
    %136 = vmatpush1.bf16.msra.mxu0 0
    %137 = vmatprep.subr.bf16.mxu0 0
    %138 = vmatpush1.bf16.msra.mxu0 0
    %139 = vmatprep.subr.bf16.mxu0 0
    %140 = vmatpush1.bf16.msra.mxu0 0
    %141 = vmatprep.subr.bf16.mxu0 0
    %142 = vmatpush1.bf16.msra.mxu0 0
    %143 = vmatprep.subr.bf16.mxu0 0
    %144 = vmatpush1.bf16.msra.mxu0 0
    %145 = vmatprep.subr.bf16.mxu0 0
    %146 = vmatpush1.bf16.msra.mxu0 0
    %147 = vmatprep.mubr.bf16.mxu0 0
    %148 = vmatmul.mubr.bf16.gmra.mrb[0].mxu0 %v43
    %v149 = vpop.f32.mrb[0].mxu0
    %v150 = vadd.f32 %v65, %v149
    %v151 = vpop.f32.mrb[0].mxu0
    %v152 = vpop.f32.mrb[0].mxu0
    %v153 = vpop.f32.mrb[0].mxu0
    %154 = vdwg.mxu0
    %v155 = vmax.f32 %v150, 0.0
    %v156 = vpack.c.bf16 %v155, %v155
    %v157 = vld [vmem:[%s5] sm:$0xf]
    %v158 = vld [vmem:[%s5 + $0x4] sm:$0xf]
    %v159 = vld [vmem:[%s5 + $0x8] sm:$0xf]
    %v160 = vld [vmem:[%s5 + $0xc] sm:$0xf]
    %v161 = vld [vmem:[%s5 + $0x10] sm:$0xf]
    %v162 = vld [vmem:[%s5 + $0x14] sm:$0xf]
    %v163 = vld [vmem:[%s5 + $0x18] sm:$0xf]
    %v164 = vld [vmem:[%s5 + $0x1c] sm:$0xf]
    %v165 = vld [vmem:[%s5 + $0x20] sm:$0xf]
    %v166 = vld [vmem:[%s5 + $0x24] sm:$0xf]
    %v167 = vld [vmem:[%s5 + $0x28] sm:$0xf]
    %v168 = vld [vmem:[%s5 + $0x2c] sm:$0xf]
    %v169 = vld [vmem:[%s5 + $0x30] sm:$0xf]
    %v170 = vld [vmem:[%s5 + $0x34] sm:$0xf]
    %v171 = vld [vmem:[%s5 + $0x38] sm:$0xf]
    %v172 = vld [vmem:[%s5 + $0x3c] sm:$0xf]
    %v173 = vld [vmem:[%s6] sm:$0x1]
    %v175 = vlaneseq
    %v176 = vshrl.u32 %v175, 7
    %v177 = vsub.s32 0, %v176
    %v178 = vrot.slane %v173, %v177
    %v196 = vunpack.c.l.b16 %v157
    %v197 = vunpack.c.l.b16 %v158
    %v198 = vunpack.c.l.b16 %v159
    %v199 = vunpack.c.l.b16 %v160
    %v200 = vunpack.c.l.b16 %v161
    %v201 = vunpack.c.l.b16 %v162
    %v202 = vunpack.c.l.b16 %v163
    %v203 = vunpack.c.l.b16 %v164
    %v204 = vunpack.c.l.b16 %v165
    %v205 = vunpack.c.l.b16 %v166
    %v206 = vunpack.c.l.b16 %v167
    %v207 = vunpack.c.l.b16 %v168
    %v208 = vunpack.c.l.b16 %v169
    %v209 = vunpack.c.l.b16 %v170
    %v210 = vunpack.c.l.b16 %v171
    %v211 = vunpack.c.l.b16 %v172
    %v212 = vpack.c.b16 %v197, %v196
    %v213 = vpack.c.b16 %v199, %v198
    %v214 = vpack.c.b16 %v201, %v200
    %v215 = vpack.c.b16 %v203, %v202
    %v216 = vpack.c.b16 %v205, %v204
    %v217 = vpack.c.b16 %v207, %v206
    %v218 = vpack.c.b16 %v209, %v208
    %v219 = vpack.c.b16 %v211, %v210
    %228 = vmatprep.subr.bf16.mxu0 0
    %229 = vmatpush1.bf16.msra.mxu0 %v212
    %230 = vmatprep.subr.bf16.mxu0 0
    %231 = vmatpush1.bf16.msra.mxu0 %v213
    %232 = vmatprep.subr.bf16.mxu0 0
    %233 = vmatpush1.bf16.msra.mxu0 %v214
    %234 = vmatprep.subr.bf16.mxu0 0
    %235 = vmatpush1.bf16.msra.mxu0 %v215
    %236 = vmatprep.subr.bf16.mxu0 0
    %237 = vmatpush1.bf16.msra.mxu0 %v216
    %238 = vmatprep.subr.bf16.mxu0 0
    %239 = vmatpush1.bf16.msra.mxu0 %v217
    %240 = vmatprep.subr.bf16.mxu0 0
    %241 = vmatpush1.bf16.msra.mxu0 %v218
    %242 = vmatprep.subr.bf16.mxu0 0
    %243 = vmatpush1.bf16.msra.mxu0 %v219
    %244 = vmatprep.subr.bf16.mxu0 0
    %245 = vmatpush1.bf16.msra.mxu0 0
    %246 = vmatprep.subr.bf16.mxu0 0
    %247 = vmatpush1.bf16.msra.mxu0 0
    %248 = vmatprep.subr.bf16.mxu0 0
    %249 = vmatpush1.bf16.msra.mxu0 0
    %250 = vmatprep.subr.bf16.mxu0 0
    %251 = vmatpush1.bf16.msra.mxu0 0
    %252 = vmatprep.subr.bf16.mxu0 0
    %253 = vmatpush1.bf16.msra.mxu0 0
    %254 = vmatprep.subr.bf16.mxu0 0
    %255 = vmatpush1.bf16.msra.mxu0 0
    %256 = vmatprep.subr.bf16.mxu0 0
    %257 = vmatpush1.bf16.msra.mxu0 0
    %258 = vmatprep.subr.bf16.mxu0 0
    %259 = vmatpush1.bf16.msra.mxu0 0
    %260 = vmatprep.mubr.bf16.mxu0 0
    %261 = vmatmul.mubr.bf16.gmra.mrb[0].mxu0 %v156
    %v262 = vpop.f32.mrb[0].mxu0
    %v263 = vadd.f32 %v178, %v262
    %v264 = vpop.f32.mrb[0].mxu0
    %v265 = vpop.f32.mrb[0].mxu0
    %v266 = vpop.f32.mrb[0].mxu0
    %267 = vdwg.mxu0
    %268 = vst [vmem:[#allocation2] sm:$0xff] %v263
    // Predicated region
    $region30: #{dimension_mixing.1} parent=1 // pred_check
      _
    $region31: #{dimension_mixing.1} parent=1 // pred_check_branch
      %270 = sbr.rel (0) target = $region33
    $region32: #{dimension_mixing.1} parent=1 // pred_region
      %s272 = ssub.s32 128, 128
      %273 = vsyncadd [#allocation3], %s272
      %s275 = sshll.u32 [#allocation2], 4
      %s276 = int_to_ptr.vmem [resolvable:$true] %s275
      %278 = dma.vmem_to_hbm [thread:$0]  %s276, 128, %s7, [#allocation3]
    $region33: #{dimension_mixing.1} parent=1 // pred_fallthru
      _
    // Predicated region
    $region34: #{dimension_mixing.1} parent=1 // pred_check
      _
    $region35: #{dimension_mixing.1} parent=1 // pred_check_branch
      %280 = sbr.rel (0) target = $region37
    $region36: #{dimension_mixing.1} parent=1 // pred_region
      %281 = dma.done [#allocation3], 128
    $region37: #{dimension_mixing.1} parent=1 // pred_fallthru
      _
    %282 = vsyncpa [#allocation3], 1

// kernel: dimension_mixing.1
$region0: #{dimension_mixing.1}
  #allocation0 [shape = 'u32[]', space=smem, size = 0x4, offset = 0x4, fixed_abs, tag = 'smem constant byte address 0x4 - core index']
  #allocation1 [shape = 'u32[144,128]{1,0:T(1,128)}', space=vmem, size = 0x12000, scoped, tag = 'internal scratch']
  %s0 = inlined_call_operand.vmem [shape: f32[8,128], index: 0, kind: input, shape index: {}]
  %s1 = inlined_call_operand.vmem [shape: f32[8,1], index: 1, kind: input, shape index: {}]
  %s2 = inlined_call_operand.vmem [shape: f32[8,1], index: 2, kind: input, shape index: {}]
  %s3 = inlined_call_operand.vmem [shape: bf16[128,128], index: 3, kind: input, shape index: {}]
  %s4 = inlined_call_operand.vmem [shape: f32[1,128], index: 4, kind: input, shape index: {}]
  %s5 = inlined_call_operand.vmem [shape: bf16[128,128], index: 5, kind: input, shape index: {}]
  %s6 = inlined_call_operand.vmem [shape: f32[1,128], index: 6, kind: input, shape index: {}]
  %s7 = inlined_call_operand.hbm [shape: f32[8,128], index: 7, kind: output, shape index: {}]
  %s8 = sld [smem:[#allocation0]]
  $region38: #{dimension_mixing.1} parent=0
    _
  %s10 = ssub.s32 1, %s8
  %s11 = scalar_select 0, %s10, %s8
  $region1: #{dimension_mixing.1} parent=0
    #allocation2 [shape = 'u8[4096]{0}', space=vmem, size = 0x1000, scoped, tag = 'output window, operand 0, single buffered']
    #allocation3 [shape = 's32[1]{0}', space=sflag, size = 0x4, scoped, tag = 'scoped memory for dimension_mixing.1']
    %12 = vsyncpa [#allocation3], 0
    // Predicated region
    $region2: #{dimension_mixing.1} parent=1 // pred_check
      _
    $region3: #{dimension_mixing.1} parent=1 // pred_check_branch
      %14 = sbr.rel (0) target = $region5
    $region4: #{dimension_mixing.1} parent=1 // pred_region
      _
    $region5: #{dimension_mixing.1} parent=1 // pred_fallthru
      _
    // Predicated region
    $region6: #{dimension_mixing.1} parent=1 // pred_check
      _
    $region7: #{dimension_mixing.1} parent=1 // pred_check_branch
      %16 = sbr.rel (0) target = $region9
    $region8: #{dimension_mixing.1} parent=1 // pred_region
      _
    $region9: #{dimension_mixing.1} parent=1 // pred_fallthru
      _
    // Predicated region
    $region10: #{dimension_mixing.1} parent=1 // pred_check
      _
    $region11: #{dimension_mixing.1} parent=1 // pred_check_branch
      %18 = sbr.rel (0) target = $region13
    $region12: #{dimension_mixing.1} parent=1 // pred_region
      _
    $region13: #{dimension_mixing.1} parent=1 // pred_fallthru
      _
    // Predicated region
    $region14: #{dimension_mixing.1} parent=1 // pred_check
      _
    $region15: #{dimension_mixing.1} parent=1 // pred_check_branch
      %20 = sbr.rel (0) target = $region17
    $region16: #{dimension_mixing.1} parent=1 // pred_region
      _
    $region17: #{dimension_mixing.1} parent=1 // pred_fallthru
      _
    // Predicated region
    $region18: #{dimension_mixing.1} parent=1 // pred_check
      _
    $region19: #{dimension_mixing.1} parent=1 // pred_check_branch
      %22 = sbr.rel (0) target = $region21
    $region20: #{dimension_mixing.1} parent=1 // pred_region
      _
    $region21: #{dimension_mixing.1} parent=1 // pred_fallthru
      _
    // Predicated region
    $region22: #{dimension_mixing.1} parent=1 // pred_check
      _
    $region23: #{dimension_mixing.1} parent=1 // pred_check_branch
      %24 = sbr.rel (0) target = $region25
    $region24: #{dimension_mixing.1} parent=1 // pred_region
      _
    $region25: #{dimension_mixing.1} parent=1 // pred_fallthru
      _
    // Predicated region
    $region26: #{dimension_mixing.1} parent=1 // pred_check
      _
    $region27: #{dimension_mixing.1} parent=1 // pred_check_branch
      %26 = sbr.rel (0) target = $region29
    $region28: #{dimension_mixing.1} parent=1 // pred_region
      _
    $region29: #{dimension_mixing.1} parent=1 // pred_fallthru
      _
    %v28 = vld [vmem:[%s0] sm:$0xff]
    %v29 = vld [vmem:[%s1] sm:$0xff]
    %31 = vset.pattern.permute.xlu0 0
    %32 = vperm.xlu0 %31, %v29
    %v33 = vpop.permute.xlu0 %32
    %v35 = vmul.f32 %v28, %v33
    %v36 = vld [vmem:[%s2] sm:$0xff]
    %38 = vset.pattern.permute.xlu0 0
    %39 = vperm.xlu0 %38, %v36
    %v40 = vpop.permute.xlu0 %39
    %v42 = vadd.f32 %v35, %v40
    %v43 = vpack.c.bf16 %v42, %v42
    %v44 = vld [vmem:[%s3] sm:$0xf]
    %v45 = vld [vmem:[%s3 + $0x4] sm:$0xf]
    %v46 = vld [vmem:[%s3 + $0x8] sm:$0xf]
    %v47 = vld [vmem:[%s3 + $0xc] sm:$0xf]
    %v48 = vld [vmem:[%s3 + $0x10] sm:$0xf]
    %v49 = vld [vmem:[%s3 + $0x14] sm:$0xf]
    %v50 = vld [vmem:[%s3 + $0x18] sm:$0xf]
    %v51 = vld [vmem:[%s3 + $0x1c] sm:$0xf]
    %v52 = vld [vmem:[%s3 + $0x20] sm:$0xf]
    %v53 = vld [vmem:[%s3 + $0x24] sm:$0xf]
    %v54 = vld [vmem:[%s3 + $0x28] sm:$0xf]
    %v55 = vld [vmem:[%s3 + $0x2c] sm:$0xf]
    %v56 = vld [vmem:[%s3 + $0x30] sm:$0xf]
    %v57 = vld [vmem:[%s3 + $0x34] sm:$0xf]
    %v58 = vld [vmem:[%s3 + $0x38] sm:$0xf]
    %v59 = vld [vmem:[%s3 + $0x3c] sm:$0xf]
    %v60 = vld [vmem:[%s4] sm:$0x1]
    %v62 = vlaneseq
    %v63 = vshrl.u32 %v62, 7
    %v64 = vsub.s32 0, %v63
    %v65 = vrot.slane %v60, %v64
    %v83 = vunpack.c.l.b16 %v44
    %v84 = vunpack.c.l.b16 %v45
    %v85 = vunpack.c.l.b16 %v46
    %v86 = vunpack.c.l.b16 %v47
    %v87 = vunpack.c.l.b16 %v48
    %v88 = vunpack.c.l.b16 %v49
    %v89 = vunpack.c.l.b16 %v50
    %v90 = vunpack.c.l.b16 %v51
    %v91 = vunpack.c.l.b16 %v52
    %v92 = vunpack.c.l.b16 %v53
    %v93 = vunpack.c.l.b16 %v54
    %v94 = vunpack.c.l.b16 %v55
    %v95 = vunpack.c.l.b16 %v56
    %v96 = vunpack.c.l.b16 %v57
    %v97 = vunpack.c.l.b16 %v58
    %v98 = vunpack.c.l.b16 %v59
    %v99 = vpack.c.b16 %v84, %v83
    %v100 = vpack.c.b16 %v86, %v85
    %v101 = vpack.c.b16 %v88, %v87
    %v102 = vpack.c.b16 %v90, %v89
    %v103 = vpack.c.b16 %v92, %v91
    %v104 = vpack.c.b16 %v94, %v93
    %v105 = vpack.c.b16 %v96, %v95
    %v106 = vpack.c.b16 %v98, %v97
    %115 = vmatprep.subr.bf16.mxu0 0
    %116 = vmatpush1.bf16.msra.mxu0 %v99
    %117 = vmatprep.subr.bf16.mxu0 0
    %118 = vmatpush1.bf16.msra.mxu0 %v100
    %119 = vmatprep.subr.bf16.mxu0 0
    %120 = vmatpush1.bf16.msra.mxu0 %v101
    %121 = vmatprep.subr.bf16.mxu0 0
    %122 = vmatpush1.bf16.msra.mxu0 %v102
    %123 = vmatprep.subr.bf16.mxu0 0
    %124 = vmatpush1.bf16.msra.mxu0 %v103
    %125 = vmatprep.subr.bf16.mxu0 0
    %126 = vmatpush1.bf16.msra.mxu0 %v104
    %127 = vmatprep.subr.bf16.mxu0 0
    %128 = vmatpush1.bf16.msra.mxu0 %v105
    %129 = vmatprep.subr.bf16.mxu0 0
    %130 = vmatpush1.bf16.msra.mxu0 %v106
    %131 = vmatprep.subr.bf16.mxu0 0
    %132 = vmatpush1.bf16.msra.mxu0 0
    %133 = vmatprep.subr.bf16.mxu0 0
    %134 = vmatpush1.bf16.msra.mxu0 0
    %135 = vmatprep.subr.bf16.mxu0 0
    %136 = vmatpush1.bf16.msra.mxu0 0
    %137 = vmatprep.subr.bf16.mxu0 0
    %138 = vmatpush1.bf16.msra.mxu0 0
    %139 = vmatprep.subr.bf16.mxu0 0
    %140 = vmatpush1.bf16.msra.mxu0 0
    %141 = vmatprep.subr.bf16.mxu0 0
    %142 = vmatpush1.bf16.msra.mxu0 0
    %143 = vmatprep.subr.bf16.mxu0 0
    %144 = vmatpush1.bf16.msra.mxu0 0
    %145 = vmatprep.subr.bf16.mxu0 0
    %146 = vmatpush1.bf16.msra.mxu0 0
    %147 = vmatprep.mubr.bf16.mxu0 0
    %148 = vmatmul.mubr.bf16.gmra.mrb[0].mxu0 %v43
    %v149 = vpop.f32.mrb[0].mxu0
    %v150 = vadd.f32 %v65, %v149
    %v151 = vpop.f32.mrb[0].mxu0
    %v152 = vpop.f32.mrb[0].mxu0
    %v153 = vpop.f32.mrb[0].mxu0
    %154 = vdwg.mxu0
    %v155 = vmax.f32 %v150, 0.0
    %v156 = vpack.c.bf16 %v155, %v155
    %v157 = vld [vmem:[%s5] sm:$0xf]
    %v158 = vld [vmem:[%s5 + $0x4] sm:$0xf]
    %v159 = vld [vmem:[%s5 + $0x8] sm:$0xf]
    %v160 = vld [vmem:[%s5 + $0xc] sm:$0xf]
    %v161 = vld [vmem:[%s5 + $0x10] sm:$0xf]
    %v162 = vld [vmem:[%s5 + $0x14] sm:$0xf]
    %v163 = vld [vmem:[%s5 + $0x18] sm:$0xf]
    %v164 = vld [vmem:[%s5 + $0x1c] sm:$0xf]
    %v165 = vld [vmem:[%s5 + $0x20] sm:$0xf]
    %v166 = vld [vmem:[%s5 + $0x24] sm:$0xf]
    %v167 = vld [vmem:[%s5 + $0x28] sm:$0xf]
    %v168 = vld [vmem:[%s5 + $0x2c] sm:$0xf]
    %v169 = vld [vmem:[%s5 + $0x30] sm:$0xf]
    %v170 = vld [vmem:[%s5 + $0x34] sm:$0xf]
    %v171 = vld [vmem:[%s5 + $0x38] sm:$0xf]
    %v172 = vld [vmem:[%s5 + $0x3c] sm:$0xf]
    %v173 = vld [vmem:[%s6] sm:$0x1]
    %v175 = vlaneseq
    %v176 = vshrl.u32 %v175, 7
    %v177 = vsub.s32 0, %v176
    %v178 = vrot.slane %v173, %v177
    %v196 = vunpack.c.l.b16 %v157
    %v197 = vunpack.c.l.b16 %v158
    %v198 = vunpack.c.l.b16 %v159
    %v199 = vunpack.c.l.b16 %v160
    %v200 = vunpack.c.l.b16 %v161
    %v201 = vunpack.c.l.b16 %v162
    %v202 = vunpack.c.l.b16 %v163
    %v203 = vunpack.c.l.b16 %v164
    %v204 = vunpack.c.l.b16 %v165
    %v205 = vunpack.c.l.b16 %v166
    %v206 = vunpack.c.l.b16 %v167
    %v207 = vunpack.c.l.b16 %v168
    %v208 = vunpack.c.l.b16 %v169
    %v209 = vunpack.c.l.b16 %v170
    %v210 = vunpack.c.l.b16 %v171
    %v211 = vunpack.c.l.b16 %v172
    %v212 = vpack.c.b16 %v197, %v196
    %v213 = vpack.c.b16 %v199, %v198
    %v214 = vpack.c.b16 %v201, %v200
    %v215 = vpack.c.b16 %v203, %v202
    %v216 = vpack.c.b16 %v205, %v204
    %v217 = vpack.c.b16 %v207, %v206
    %v218 = vpack.c.b16 %v209, %v208
    %v219 = vpack.c.b16 %v211, %v210
    %228 = vmatprep.subr.bf16.mxu0 0
    %229 = vmatpush1.bf16.msra.mxu0 %v212
    %230 = vmatprep.subr.bf16.mxu0 0
    %231 = vmatpush1.bf16.msra.mxu0 %v213
    %232 = vmatprep.subr.bf16.mxu0 0
    %233 = vmatpush1.bf16.msra.mxu0 %v214
    %234 = vmatprep.subr.bf16.mxu0 0
    %235 = vmatpush1.bf16.msra.mxu0 %v215
    %236 = vmatprep.subr.bf16.mxu0 0
    %237 = vmatpush1.bf16.msra.mxu0 %v216
    %238 = vmatprep.subr.bf16.mxu0 0
    %239 = vmatpush1.bf16.msra.mxu0 %v217
    %240 = vmatprep.subr.bf16.mxu0 0
    %241 = vmatpush1.bf16.msra.mxu0 %v218
    %242 = vmatprep.subr.bf16.mxu0 0
    %243 = vmatpush1.bf16.msra.mxu0 %v219
    %244 = vmatprep.subr.bf16.mxu0 0
    %245 = vmatpush1.bf16.msra.mxu0 0
    %246 = vmatprep.subr.bf16.mxu0 0
    %247 = vmatpush1.bf16.msra.mxu0 0
    %248 = vmatprep.subr.bf16.mxu0 0
    %249 = vmatpush1.bf16.msra.mxu0 0
    %250 = vmatprep.subr.bf16.mxu0 0
    %251 = vmatpush1.bf16.msra.mxu0 0
    %252 = vmatprep.subr.bf16.mxu0 0
    %253 = vmatpush1.bf16.msra.mxu0 0
    %254 = vmatprep.subr.bf16.mxu0 0
    %255 = vmatpush1.bf16.msra.mxu0 0
    %256 = vmatprep.subr.bf16.mxu0 0
    %257 = vmatpush1.bf16.msra.mxu0 0
    %258 = vmatprep.subr.bf16.mxu0 0
    %259 = vmatpush1.bf16.msra.mxu0 0
    %260 = vmatprep.mubr.bf16.mxu0 0
    %261 = vmatmul.mubr.bf16.gmra.mrb[0].mxu0 %v156
    %v262 = vpop.f32.mrb[0].mxu0
    %v263 = vadd.f32 %v178, %v262
    %v264 = vpop.f32.mrb[0].mxu0
    %v265 = vpop.f32.mrb[0].mxu0
    %v266 = vpop.f32.mrb[0].mxu0
    %267 = vdwg.mxu0
    %268 = vst [vmem:[#allocation2] sm:$0xff] %v263
    // Predicated region
    $region30: #{dimension_mixing.1} parent=1 // pred_check
      _
    $region31: #{dimension_mixing.1} parent=1 // pred_check_branch
      %270 = sbr.rel (0) target = $region33
    $region32: #{dimension_mixing.1} parent=1 // pred_region
      %s272 = ssub.s32 128, 128
      %273 = vsyncadd [#allocation3], %s272
      %s275 = sshll.u32 [#allocation2], 4
      %s276 = int_to_ptr.vmem [resolvable:$true] %s275
      %278 = dma.vmem_to_hbm [thread:$0]  %s276, 128, %s7, [#allocation3]
    $region33: #{dimension_mixing.1} parent=1 // pred_fallthru
      _
    // Predicated region
    $region34: #{dimension_mixing.1} parent=1 // pred_check
      _
    $region35: #{dimension_mixing.1} parent=1 // pred_check_branch
      %280 = sbr.rel (0) target = $region37
    $region36: #{dimension_mixing.1} parent=1 // pred_region
      %281 = dma.done [#allocation3], 128
    $region37: #{dimension_mixing.1} parent=1 // pred_fallthru
      _
    %282 = vsyncpa [#allocation3], 1

</llo_original>
